<compile_context>
chip_gen: v7x
topology: tpu7x:2x2x1
jax: 0.10.0
libtpu: 0.0.40
codegen_flags: <defaults>
</compile_context>

<pallas_src>
import math

import jax
import jax.numpy as jnp
from jax.experimental import pallas as pl
from jax.experimental.pallas import tpu as pltpu

_LANE = 128


def _round_up(x, m):
    return ((x + m - 1) // m) * m


def _cdiv(a, b):
    return (a + b - 1) // b


def _sublane(dtype):
    return max(8, 32 // jnp.dtype(dtype).itemsize)


def _vmem_budget_bytes():
    """Chip-aware VMEM budget (v7x: 64 MiB physical, v5e/v6e: 128 MiB)."""
    cap = 64 * 1024 * 1024  # conservative fallback == v7x physical
    try:
        info = pltpu.get_tpu_info()
        cap = int(getattr(info, "vmem_capacity_bytes", cap))
    except Exception:
        pass
    # Leave headroom for compiler-internal scratch: 48 MiB on v7x, 96 MiB v5e/v6e.
    return min(int(cap * 3 // 4), 96 * 1024 * 1024)


def _pick_tile(total, target, granule=_LANE):
    """Largest multiple of `granule` that divides `total` and is <= target."""
    q = total // granule
    best = granule
    for d in range(1, q + 1):
        if q % d == 0 and d * granule <= target:
            best = d * granule
    return best


# ---------------- weight-resident fast path (single K block) ----------------


def _fused_bias_kernel(x_ref, w_ref, b_ref, o_ref):
    o_ref[...] = (
        jnp.dot(x_ref[...], w_ref[...], preferred_element_type=jnp.float32)
        + b_ref[...].astype(jnp.float32)
    ).astype(o_ref.dtype)


def _fused_nobias_kernel(x_ref, w_ref, o_ref):
    o_ref[...] = jnp.dot(
        x_ref[...], w_ref[...], preferred_element_type=jnp.float32
    ).astype(o_ref.dtype)


# ------- general K-loop path, f32 output: accumulate straight into o_ref -----


def _kloop_f32_bias_kernel(x_ref, w_ref, b_ref, o_ref):
    @pl.when(pl.program_id(2) == 0)
    def _():
        o_ref[...] = jnp.broadcast_to(
            b_ref[...].astype(jnp.float32), o_ref.shape
        )

    o_ref[...] += jnp.dot(
        x_ref[...], w_ref[...], preferred_element_type=jnp.float32
    )


def _kloop_f32_nobias_kernel(x_ref, w_ref, o_ref):
    @pl.when(pl.program_id(2) == 0)
    def _():
        o_ref[...] = jnp.zeros_like(o_ref)

    o_ref[...] += jnp.dot(
        x_ref[...], w_ref[...], preferred_element_type=jnp.float32
    )


# ------- general K-loop path, non-f32 output: f32 VMEM accumulator -----------


def _kloop_acc_bias_kernel(x_ref, w_ref, b_ref, o_ref, acc_ref):
    k = pl.program_id(2)

    @pl.when(k == 0)
    def _():
        acc_ref[...] = jnp.broadcast_to(
            b_ref[...].astype(jnp.float32), acc_ref.shape
        )

    acc_ref[...] += jnp.dot(
        x_ref[...], w_ref[...], preferred_element_type=jnp.float32
    )

    @pl.when(k == pl.num_programs(2) - 1)
    def _():
        o_ref[...] = acc_ref[...].astype(o_ref.dtype)


def _kloop_acc_nobias_kernel(x_ref, w_ref, o_ref, acc_ref):
    k = pl.program_id(2)

    @pl.when(k == 0)
    def _():
        acc_ref[...] = jnp.zeros_like(acc_ref)

    acc_ref[...] += jnp.dot(
        x_ref[...], w_ref[...], preferred_element_type=jnp.float32
    )

    @pl.when(k == pl.num_programs(2) - 1)
    def _():
        o_ref[...] = acc_ref[...].astype(o_ref.dtype)


def linear_norm_forward(
    x,
    weight_t,
    bias=None,
    *,
    out_dim=None,
    tm=512,
    tn=512,
    tk=512,
    force_general=False,
):
    """y = x @ W^T + b, matching torch.nn.Linear(in_dim, out_dim).

    x:        (..., in_dim)
    weight_t: (Kp, Np) pre-transposed torch weight (W^T), preferably pre-padded
              with zeros to lane multiples (see init_linear_norm_params).
    bias:     (out_dim,) / (Np,) or None; padded tail (if any) must be zero.
    out_dim:  logical output width (defaults to weight_t.shape[1]).
    """
    kdim_w, ndim_w = weight_t.shape
    in_dim = x.shape[-1]
    if in_dim > kdim_w:
        raise ValueError("x feature dim exceeds weight_t rows")
    if out_dim is None:
        out_dim = ndim_w

    lead_shape = x.shape[:-1]
    M = int(math.prod(lead_shape)) if lead_shape else 1
    x2d = x.reshape(M, in_dim)

    dtype = x.dtype
    itemsize = jnp.dtype(dtype).itemsize
    sub = _sublane(dtype)

    # Lane-align weight/bias. Free when the caller stored them pre-padded
    # (the common path); otherwise costs one HBM pass over W per call.
    Kp = _round_up(kdim_w, _LANE)
    Np = _round_up(ndim_w, _LANE)
    w2d = weight_t
    if (Kp, Np) != (kdim_w, ndim_w):
        w2d = jnp.pad(w2d, ((0, Kp - kdim_w), (0, Np - ndim_w)))
    b2d = None
    if bias is not None:
        b2d = bias.reshape(1, -1)
        if b2d.shape[1] != Np:
            b2d = jnp.pad(b2d, ((0, 0), (0, Np - b2d.shape[1])))

    vmem_budget = _vmem_budget_bytes()
    acc_f32_direct = jnp.dtype(dtype) == jnp.float32

    # ---------------- weight-resident fast path ----------------
    use_fast = not force_general
    if use_fast:
        tm_f = min(_round_up(tm, sub), _round_up(M, sub))
        m_blocks = _cdiv(M, tm_f)
        tn_f = Np
        # Only one M block: split N so both TensorCores (v7x) get work.
        if m_blocks == 1 and Np % (2 * _LANE) == 0:
            tn_f = Np // 2
        n_blocks = Np // tn_f
        fast_bytes = 2 * (tm_f * Kp + Kp * tn_f + tm_f * tn_f) * itemsize
        use_fast = fast_bytes <= vmem_budget

    if use_fast:
        Mp = m_blocks * tm_f
        if (Mp, Kp) != (M, in_dim):
            x2d = jnp.pad(x2d, ((0, Mp - M), (0, Kp - in_dim)))

        grid = (n_blocks, m_blocks)  # N outer, M inner: W streamed once.
        x_spec = pl.BlockSpec((tm_f, Kp), lambda j, i: (i, 0))
        w_spec = pl.BlockSpec((Kp, tn_f), lambda j, i: (0, j))
        o_spec = pl.BlockSpec((tm_f, tn_f), lambda j, i: (i, j))
        cost = pl.CostEstimate(
            flops=2 * Mp * Kp * Np,
            bytes_accessed=itemsize * (n_blocks * Mp * Kp + Kp * Np + Mp * Np)
            + (Np * itemsize if b2d is not None else 0),
            transcendentals=0,
        )
        cparams = pltpu.CompilerParams(
            dimension_semantics=("parallel", "parallel"),
            vmem_limit_bytes=vmem_budget,
        )
        out_shape = jax.ShapeDtypeStruct((Mp, Np), dtype)

        if b2d is not None:
            b_spec = pl.BlockSpec((1, tn_f), lambda j, i: (0, j))
            out2d = pl.pallas_call(
                _fused_bias_kernel,
                out_shape=out_shape,
                grid_spec=pltpu.PrefetchScalarGridSpec(
                    num_scalar_prefetch=0,
                    grid=grid,
                    in_specs=[x_spec, w_spec, b_spec],
                    out_specs=o_spec,
                ),
                compiler_params=cparams,
                cost_estimate=cost,
            )(x2d, w2d, b2d)
        else:
            out2d = pl.pallas_call(
                _fused_nobias_kernel,
                out_shape=out_shape,
                grid_spec=pltpu.PrefetchScalarGridSpec(
                    num_scalar_prefetch=0,
                    grid=grid,
                    in_specs=[x_spec, w_spec],
                    out_specs=o_spec,
                ),
                compiler_params=cparams,
                cost_estimate=cost,
            )(x2d, w2d)
    else:
        # ---------------- general (M, N, K) K-loop path ----------------
        tm_g = tm
        if M >= 4096:
            tm_g = max(tm_g, 1024)  # big-M: halve weight re-streaming
        tm_g = min(_round_up(tm_g, sub), _round_up(M, sub))
        tn_g = _pick_tile(Np, tn)
        tk_g = _pick_tile(Kp, tk)

        def _gbytes(tm_):
            b = 2 * (tm_ * tk_g + tk_g * tn_g + tm_ * tn_g) * itemsize
            if not acc_f32_direct:
                b += tm_ * tn_g * 4  # f32 accumulator scratch
            return b

        while tm_g > sub and _gbytes(tm_g) > vmem_budget:
            tm_g = max(sub, _round_up(tm_g // 2, sub))

        m_blocks = _cdiv(M, tm_g)
        n_blocks = Np // tn_g
        k_blocks = Kp // tk_g
        Mp = m_blocks * tm_g
        if (Mp, Kp) != (M, in_dim):
            x2d = jnp.pad(x2d, ((0, Mp - M), (0, Kp - in_dim)))

        grid = (m_blocks, n_blocks, k_blocks)
        x_spec = pl.BlockSpec((tm_g, tk_g), lambda i, j, k: (i, k))
        w_spec = pl.BlockSpec((tk_g, tn_g), lambda i, j, k: (k, j))
        o_spec = pl.BlockSpec((tm_g, tn_g), lambda i, j, k: (i, j))
        cost = pl.CostEstimate(
            flops=2 * Mp * Kp * Np,
            # x re-streamed per N block, W re-streamed per M block.
            bytes_accessed=itemsize
            * (n_blocks * Mp * Kp + m_blocks * Kp * Np + Mp * Np)
            + (Np * itemsize if b2d is not None else 0),
            transcendentals=0,
        )
        cparams = pltpu.CompilerParams(
            dimension_semantics=("parallel", "parallel", "arbitrary"),
            vmem_limit_bytes=vmem_budget,
        )
        out_shape = jax.ShapeDtypeStruct((Mp, Np), dtype)
        scratch = [] if acc_f32_direct else [pltpu.VMEM((tm_g, tn_g), jnp.float32)]

        if b2d is not None:
            kern = _kloop_f32_bias_kernel if acc_f32_direct else _kloop_acc_bias_kernel
            b_spec = pl.BlockSpec((1, tn_g), lambda i, j, k: (0, j))
            out2d = pl.pallas_call(
                kern,
                out_shape=out_shape,
                grid_spec=pltpu.PrefetchScalarGridSpec(
                    num_scalar_prefetch=0,
                    grid=grid,
                    in_specs=[x_spec, w_spec, b_spec],
                    out_specs=o_spec,
                    scratch_shapes=scratch,
                ),
                compiler_params=cparams,
                cost_estimate=cost,
            )(x2d, w2d, b2d)
        else:
            kern = (_kloop_f32_nobias_kernel if acc_f32_direct
                    else _kloop_acc_nobias_kernel)
            out2d = pl.pallas_call(
                kern,
                out_shape=out_shape,
                grid_spec=pltpu.PrefetchScalarGridSpec(
                    num_scalar_prefetch=0,
                    grid=grid,
                    in_specs=[x_spec, w_spec],
                    out_specs=o_spec,
                    scratch_shapes=scratch,
                ),
                compiler_params=cparams,
                cost_estimate=cost,
            )(x2d, w2d)

    # Fast-path: no slice/copy when shapes are already aligned.
    if (Mp, Np) != (M, out_dim):
        out2d = out2d[:M, :out_dim]
    return out2d.reshape(*lead_shape, out_dim)


def init_linear_norm_params(key, in_dim, out_dim, bias=True,
                            w_init_gain="linear", dtype=jnp.float32):
    """Init matching LinearNorm.__init__ (xavier_uniform + default bias init).

    The weight is returned PRE-TRANSPOSED to (in_dim, out_dim) and PRE-PADDED
    with zeros to lane multiples, so the forward pass never pads or transposes
    the weight in HBM. Pass out_dim to linear_norm_forward to recover the
    logical output width. Use dtype=jnp.bfloat16 on v6e/v7x for MXU peak
    (numerics-accepted change); f32 keeps torch parity.
    """
    gains = {"linear": 1.0, "sigmoid": 1.0, "tanh": 5.0 / 3.0,
             "relu": math.sqrt(2.0)}
    gain = gains.get(w_init_gain, 1.0)
    kw, kb = jax.random.split(key)
    # xavier_uniform_ on the torch-layout (out_dim, in_dim) weight.
    a = gain * math.sqrt(6.0 / (in_dim + out_dim))
    weight = jax.random.uniform(kw, (out_dim, in_dim), jnp.float32, -a, a)
    weight_t = weight.T.astype(dtype)  # one-time transpose at init
    Kp = _round_up(in_dim, _LANE)
    Np = _round_up(out_dim, _LANE)
    if (Kp, Np) != (in_dim, out_dim):
        weight_t = jnp.pad(weight_t, ((0, Kp - in_dim), (0, Np - out_dim)))
    if bias:
        bound = 1.0 / math.sqrt(in_dim)
        b = jax.random.uniform(kb, (out_dim,), jnp.float32, -bound, bound)
        b = b.astype(dtype)
        if Np != out_dim:
            b = jnp.pad(b, (0, Np - out_dim))
    else:
        b = None
    return weight_t, b


if __name__ == "__main__":
    key = jax.random.PRNGKey(0)
    k_x, k_p, k_x2, k_p2 = jax.random.split(key, 4)

    # --- small Tacotron-like shape, f32, weight-resident fast path ---
    batch, seq, in_dim, out_dim = 2, 8, 32, 64
    x = jax.random.normal(k_x, (batch, seq, in_dim), dtype=jnp.float32)
    weight_t, bias = init_linear_norm_params(
        k_p, in_dim, out_dim, bias=True, w_init_gain="tanh"
    )
    w_log = weight_t[:in_dim, :out_dim]
    b_log = bias[:out_dim]

    y = jax.block_until_ready(
        linear_norm_forward(x, weight_t, bias, out_dim=out_dim)
    )
    y_ref = x @ w_log + b_log
    assert y.shape == (batch, seq, out_dim)
    assert jnp.allclose(y, y_ref, atol=1e-4, rtol=1e-4), "fast-path mismatch"

    # --- bias-free path ---
    y_nb = jax.block_until_ready(
        linear_norm_forward(x, weight_t, None, out_dim=out_dim)
    )
    assert jnp.allclose(y_nb, x @ w_log, atol=1e-4, rtol=1e-4), "no-bias mismatch"

    # --- general K-loop path (forced), f32 direct-accumulate variant ---
    in2, out2 = 256, 192
    x2 = jax.random.normal(k_x2, (batch, seq, in2), dtype=jnp.float32)
    w2_t, b2 = init_linear_norm_params(k_p2, in2, out2, bias=True)
    y2 = jax.block_until_ready(
        linear_norm_forward(x2, w2_t, b2, out_dim=out2, tk=128, tn=128,
                            force_general=True)
    )
    y2_ref = x2 @ w2_t[:in2, :out2] + b2[:out2]
    assert y2.shape == (batch, seq, out2)
    assert jnp.allclose(y2, y2_ref, atol=1e-3, rtol=1e-3), "k-loop mismatch"

    # --- general K-loop path with bf16 operands (f32 scratch accumulator) ---
    xb = x2.astype(jnp.bfloat16)
    wb_t, bb = init_linear_norm_params(k_p2, in2, out2, bias=True,
                                       dtype=jnp.bfloat16)
    yb = jax.block_until_ready(
        linear_norm_forward(xb, wb_t, bb, out_dim=out2, tk=128, tn=128,
                            force_general=True)
    )
    yb_ref = (xb.astype(jnp.float32) @ wb_t[:in2, :out2].astype(jnp.float32)
              + bb[:out2].astype(jnp.float32))
    assert jnp.allclose(yb.astype(jnp.float32), yb_ref, atol=5e-2, rtol=5e-2), \
        "bf16 k-loop mismatch"

    print("KERNEL_OK")
</pallas_src>

<mosaic_0001>
module attributes {stable_mosaic.version = 11 : i64} {
  func.func @_fused_bias_kernel(%arg0: i32, %arg1: i32, %arg2: memref<16x128xf32, #tpu.memory_space<vmem>>, %arg3: memref<128x128xf32, #tpu.memory_space<vmem>>, %arg4: memref<1x128xf32, #tpu.memory_space<vmem>>, %arg5: memref<16x128xf32, #tpu.memory_space<vmem>>) attributes {dimension_semantics = [#tpu.dimension_semantics<parallel>, #tpu.dimension_semantics<parallel>], iteration_bounds = array<i64: 1, 1>, scalar_prefetch = 0 : i64, scratch_operands = 0 : i64, tpu.core_type = #tpu.core_type<tc>, window_params = [{transform_indices = @transform_0, window_bounds = array<i64: 16, 128>}, {transform_indices = @transform_1, window_bounds = array<i64: 128, 128>}, {transform_indices = @transform_2, window_bounds = array<i64: 1, 128>}, {transform_indices = @transform_3, window_bounds = array<i64: 16, 128>}]} {
    %c0 = arith.constant 0 : index
    %c0_0 = arith.constant 0 : index
    %0 = vector.load %arg2[%c0, %c0_0] : memref<16x128xf32, #tpu.memory_space<vmem>>, vector<16x128xf32>
    %c0_1 = arith.constant 0 : index
    %c0_2 = arith.constant 0 : index
    %1 = vector.load %arg3[%c0_1, %c0_2] : memref<128x128xf32, #tpu.memory_space<vmem>>, vector<128x128xf32>
    %cst = arith.constant dense<0.000000e+00> : vector<16x128xf32>
    %2 = tpu.matmul %0, %1, %cst {dimension_numbers = #tpu.dot_dimension_numbers<[1], [0], [0], [1], [0, 0, 1, 1], [], []>} : vector<16x128xf32>, vector<128x128xf32>, vector<16x128xf32> -> vector<16x128xf32>
    %c0_3 = arith.constant 0 : index
    %c0_4 = arith.constant 0 : index
    %3 = vector.load %arg4[%c0_3, %c0_4] : memref<1x128xf32, #tpu.memory_space<vmem>>, vector<1x128xf32>
    %4 = vector.broadcast %3 : vector<1x128xf32> to vector<16x128xf32>
    %5 = arith.addf %2, %4 : vector<16x128xf32>
    %c0_5 = arith.constant 0 : index
    %c0_6 = arith.constant 0 : index
    %6 = vector.load %arg5[%c0_5, %c0_6] : memref<16x128xf32, #tpu.memory_space<vmem>>, vector<16x128xf32>
    tpu.vector_store %arg5[%c0_5, %c0_6], %5 {strides = array<i32>} : memref<16x128xf32, #tpu.memory_space<vmem>>, vector<16x128xf32>,
    return
  }
  func.func @transform_0(%arg0: i32, %arg1: i32) -> (i32, i32) {
    %c0_i32 = arith.constant 0 : i32
    %c0_i32_0 = arith.constant 0 : i32
    return %arg1, %c0_i32 : i32, i32
  }
  func.func @transform_1(%arg0: i32, %arg1: i32) -> (i32, i32) {
    %c0_i32 = arith.constant 0 : i32
    %c0_i32_0 = arith.constant 0 : i32
    return %c0_i32, %arg0 : i32, i32
  }
  func.func @transform_2(%arg0: i32, %arg1: i32) -> (i32, i32) {
    %c0_i32 = arith.constant 0 : i32
    %c0_i32_0 = arith.constant 0 : i32
    return %c0_i32, %arg0 : i32, i32
  }
  func.func @transform_3(%arg0: i32, %arg1: i32) -> (i32, i32) {
    %c0_i32 = arith.constant 0 : i32
    return %arg1, %arg0 : i32, i32
  }
}

</mosaic_0001>

<llo_original>
// kernel: tpu_custom_call.1
$region0: #{tpu_custom_call.1}
  #allocation0 [shape = 'u32[]', space=smem, size = 0x4, offset = 0x4, fixed_abs, tag = 'smem constant byte address 0x4 - core index']
  #allocation1 [shape = 'u32[144,128]{1,0:T(1,128)}', space=vmem, size = 0x12000, scoped, tag = 'internal scratch']
  %s0 = inlined_call_operand.hbm [shape: f32[16,128], index: 0, kind: input, shape index: {}]
  %s1 = inlined_call_operand.hbm [shape: f32[128,128], index: 1, kind: input, shape index: {}]
  %s2 = inlined_call_operand.vmem [shape: f32[1,128], index: 2, kind: input, shape index: {}]
  %s3 = inlined_call_operand.hbm [shape: f32[16,128], index: 3, kind: output, shape index: {}]
  %s4 = sld [smem:[#allocation0]]
  $region30: #{tpu_custom_call.1} parent=0
    _
  %s6 = ssub.s32 1, %s4
  %s7 = scalar_select 0, %s6, %s4
  $region1: #{tpu_custom_call.1} parent=0
    #allocation2 [shape = 'u8[8192]{0}', space=vmem, size = 0x2000, scoped, tag = 'input window, operand 0, single buffered']
    #allocation3 [shape = 's32[1]{0}', space=sflag, size = 0x4, scoped, tag = 'scoped memory for tpu_custom_call.1']
    #allocation4 [shape = 's32[1]{0}', space=sflag, size = 0x4, scoped, tag = 'scoped memory for tpu_custom_call.1']
    #allocation5 [shape = 'u8[65536]{0}', space=vmem, size = 0x10000, scoped, tag = 'input window, operand 1, single buffered']
    #allocation6 [shape = 's32[1]{0}', space=sflag, size = 0x4, scoped, tag = 'scoped memory for tpu_custom_call.1']
    #allocation7 [shape = 'u8[8192]{0}', space=vmem, size = 0x2000, scoped, tag = 'output window, operand 0, single buffered']
    %8 = vsyncpa [#allocation3], 0
    %9 = vsyncpa [#allocation6], 0
    %10 = vsyncpa [#allocation4], 0
    // Predicated region
    $region2: #{tpu_custom_call.1} parent=1 // pred_check
      _
    $region3: #{tpu_custom_call.1} parent=1 // pred_check_branch
      %12 = sbr.rel (0) target = $region5
    $region4: #{tpu_custom_call.1} parent=1 // pred_region
      %s14 = ssub.s32 256, 256
      %15 = vsyncadd [#allocation3], %s14
      %s16 = sshll.u32 [#allocation2], 4
      %s17 = int_to_ptr.vmem [resolvable:$true] %s16
      %22 = dma.hbm_to_vmem [thread:$0]  %s0, 256, %s17, [#allocation3], 128, 128, 8
    $region5: #{tpu_custom_call.1} parent=1 // pred_fallthru
      _
    // Predicated region
    $region6: #{tpu_custom_call.1} parent=1 // pred_check
      _
    $region7: #{tpu_custom_call.1} parent=1 // pred_check_branch
      %24 = sbr.rel (0) target = $region9
    $region8: #{tpu_custom_call.1} parent=1 // pred_region
      %s26 = ssub.s32 2048, 2048
      %27 = vsyncadd [#allocation6], %s26
      %s28 = sshll.u32 [#allocation5], 4
      %s29 = int_to_ptr.vmem [resolvable:$true] %s28
      %34 = dma.hbm_to_vmem [thread:$0]  %s1, 2048, %s29, [#allocation6], 128, 128, 8
    $region9: #{tpu_custom_call.1} parent=1 // pred_fallthru
      _
    // Predicated region
    $region10: #{tpu_custom_call.1} parent=1 // pred_check
      _
    $region11: #{tpu_custom_call.1} parent=1 // pred_check_branch
      %36 = sbr.rel (0) target = $region13
    $region12: #{tpu_custom_call.1} parent=1 // pred_region
      _
    $region13: #{tpu_custom_call.1} parent=1 // pred_fallthru
      _
    // Predicated region
    $region14: #{tpu_custom_call.1} parent=1 // pred_check
      _
    $region15: #{tpu_custom_call.1} parent=1 // pred_check_branch
      %38 = sbr.rel (0) target = $region17
    $region16: #{tpu_custom_call.1} parent=1 // pred_region
      %39 = dma.done [#allocation3], 256
    $region17: #{tpu_custom_call.1} parent=1 // pred_fallthru
      _
    // Predicated region
    $region18: #{tpu_custom_call.1} parent=1 // pred_check
      _
    $region19: #{tpu_custom_call.1} parent=1 // pred_check_branch
      %41 = sbr.rel (0) target = $region21
    $region20: #{tpu_custom_call.1} parent=1 // pred_region
      %42 = dma.done [#allocation6], 2048
    $region21: #{tpu_custom_call.1} parent=1 // pred_fallthru
      _
    %v43 = vld [vmem:[#allocation2] sm:$0xff]
    %v44 = vld [vmem:[#allocation2 + $0x8] sm:$0xff]
    %v45 = vld [vmem:[#allocation5] sm:$0xff]
    %v46 = vld [vmem:[#allocation5 + $0x8] sm:$0xff]
    %v47 = vld [vmem:[#allocation5 + $0x10] sm:$0xff]
    %v48 = vld [vmem:[#allocation5 + $0x18] sm:$0xff]
    %v49 = vld [vmem:[#allocation5 + $0x20] sm:$0xff]
    %v50 = vld [vmem:[#allocation5 + $0x28] sm:$0xff]
    %v51 = vld [vmem:[#allocation5 + $0x30] sm:$0xff]
    %v52 = vld [vmem:[#allocation5 + $0x38] sm:$0xff]
    %v53 = vld [vmem:[#allocation5 + $0x40] sm:$0xff]
    %v54 = vld [vmem:[#allocation5 + $0x48] sm:$0xff]
    %v55 = vld [vmem:[#allocation5 + $0x50] sm:$0xff]
    %v56 = vld [vmem:[#allocation5 + $0x58] sm:$0xff]
    %v57 = vld [vmem:[#allocation5 + $0x60] sm:$0xff]
    %v58 = vld [vmem:[#allocation5 + $0x68] sm:$0xff]
    %v59 = vld [vmem:[#allocation5 + $0x70] sm:$0xff]
    %v60 = vld [vmem:[#allocation5 + $0x78] sm:$0xff]
    %v61 = vld [vmem:[%s2] sm:$0x1]
    %v63 = vlaneseq
    %v64 = vshrl.u32 %v63, 7
    %v65 = vsub.s32 0, %v64
    %v66 = vrot.slane %v61, %v65
    %68 = vmatprep.subr.mxu0 0.0
    %69 = vmatpush1.msra.mxu0 %v45
    %70 = vmatprep.subr.mxu0 0.0
    %71 = vmatpush1.msra.mxu0 %v46
    %72 = vmatprep.subr.mxu0 0.0
    %73 = vmatpush1.msra.mxu0 %v47
    %74 = vmatprep.subr.mxu0 0.0
    %75 = vmatpush1.msra.mxu0 %v48
    %76 = vmatprep.subr.mxu0 0.0
    %77 = vmatpush1.msra.mxu0 %v49
    %78 = vmatprep.subr.mxu0 0.0
    %79 = vmatpush1.msra.mxu0 %v50
    %80 = vmatprep.subr.mxu0 0.0
    %81 = vmatpush1.msra.mxu0 %v51
    %82 = vmatprep.subr.mxu0 0.0
    %83 = vmatpush1.msra.mxu0 %v52
    %84 = vmatprep.subr.mxu0 0.0
    %85 = vmatpush1.msra.mxu0 %v53
    %86 = vmatprep.subr.mxu0 0.0
    %87 = vmatpush1.msra.mxu0 %v54
    %88 = vmatprep.subr.mxu0 0.0
    %89 = vmatpush1.msra.mxu0 %v55
    %90 = vmatprep.subr.mxu0 0.0
    %91 = vmatpush1.msra.mxu0 %v56
    %92 = vmatprep.subr.mxu0 0.0
    %93 = vmatpush1.msra.mxu0 %v57
    %94 = vmatprep.subr.mxu0 0.0
    %95 = vmatpush1.msra.mxu0 %v58
    %96 = vmatprep.subr.mxu0 0.0
    %97 = vmatpush1.msra.mxu0 %v59
    %98 = vmatprep.subr.mxu0 0.0
    %99 = vmatpush1.msra.mxu0 %v60
    %100 = vmatprep.subr.mxu0 0.0
    %101 = vmatpush1.msra.mxu0 0.0
    %102 = vmatprep.subr.mxu0 0.0
    %103 = vmatpush1.msra.mxu0 0.0
    %104 = vmatprep.subr.mxu0 0.0
    %105 = vmatpush1.msra.mxu0 0.0
    %106 = vmatprep.subr.mxu0 0.0
    %107 = vmatpush1.msra.mxu0 0.0
    %108 = vmatprep.subr.mxu0 0.0
    %109 = vmatpush1.msra.mxu0 0.0
    %110 = vmatprep.subr.mxu0 0.0
    %111 = vmatpush1.msra.mxu0 0.0
    %112 = vmatprep.subr.mxu0 0.0
    %113 = vmatpush1.msra.mxu0 0.0
    %114 = vmatprep.subr.mxu0 0.0
    %115 = vmatpush1.msra.mxu0 0.0
    %116 = vmatprep.subr.mxu0 0.0
    %117 = vmatpush1.msra.mxu0 0.0
    %118 = vmatprep.subr.mxu0 0.0
    %119 = vmatpush1.msra.mxu0 0.0
    %120 = vmatprep.subr.mxu0 0.0
    %121 = vmatpush1.msra.mxu0 0.0
    %122 = vmatprep.subr.mxu0 0.0
    %123 = vmatpush1.msra.mxu0 0.0
    %124 = vmatprep.subr.mxu0 0.0
    %125 = vmatpush1.msra.mxu0 0.0
    %126 = vmatprep.subr.mxu0 0.0
    %127 = vmatpush1.msra.mxu0 0.0
    %128 = vmatprep.subr.mxu0 0.0
    %129 = vmatpush1.msra.mxu0 0.0
    %130 = vmatprep.subr.mxu0 0.0
    %131 = vmatpush1.msra.mxu0 0.0
    %132 = vmatprep.mubr.f32.mxu0 0.0
    %133 = vmatmul.mubr.f32.gmra.mrb[0].mxu0 %v43
    %v134 = vpop.f32.mrb[0].mxu0
    %v135 = vadd.f32 %v66, %v134
    %v136 = vpop.f32.mrb[0].mxu0
    %137 = vmatprep.mubr.f32.mxu0 0.0
    %138 = vmatmul.mubr.f32.gmra.mrb[0].mxu0 %v44
    %v139 = vpop.f32.mrb[0].mxu0
    %v140 = vadd.f32 %v66, %v139
    %v141 = vpop.f32.mrb[0].mxu0
    %142 = vdwg.mxu0
    %143 = vst [vmem:[#allocation7] sm:$0xff] %v135
    %144 = vst [vmem:[#allocation7 + $0x8] sm:$0xff] %v140
    // Predicated region
    $region22: #{tpu_custom_call.1} parent=1 // pred_check
      _
    $region23: #{tpu_custom_call.1} parent=1 // pred_check_branch
      %146 = sbr.rel (0) target = $region25
    $region24: #{tpu_custom_call.1} parent=1 // pred_region
      %s148 = ssub.s32 256, 256
      %149 = vsyncadd [#allocation4], %s148
      %s150 = sshll.u32 [#allocation7], 4
      %s151 = int_to_ptr.vmem [resolvable:$true] %s150
      %156 = dma.vmem_to_hbm [thread:$0]  %s151, 256, %s3, [#allocation4], 128, 128, 8
    $region25: #{tpu_custom_call.1} parent=1 // pred_fallthru
      _
    // Predicated region
    $region26: #{tpu_custom_call.1} parent=1 // pred_check
      _
    $region27: #{tpu_custom_call.1} parent=1 // pred_check_branch
      %158 = sbr.rel (0) target = $region29
    $region28: #{tpu_custom_call.1} parent=1 // pred_region
      %159 = dma.done [#allocation4], 256
    $region29: #{tpu_custom_call.1} parent=1 // pred_fallthru
      _
    %160 = vsyncpa [#allocation3], 1
    %161 = vsyncpa [#allocation6], 1
    %162 = vsyncpa [#allocation4], 1

</llo_original>
